<compile_context>
chip_gen: v7x
topology: tpu7x:2x2x1
jax: 0.10.0
libtpu: 0.0.40
codegen_flags: <defaults>
</compile_context>

<pallas_src>
import jax
import jax.numpy as jnp
from jax.experimental import pallas as pl
from jax.experimental.pallas import tpu as pltpu

# Only split the HBM->HBM copy into multiple DMA descriptors when there is
# enough data to amortize the extra descriptor issue cost.
_CHUNK_THRESHOLD_BYTES = 1 << 20   # 1 MiB
_MAX_CHUNKS = 8


def _chunk_bounds(leading, nbytes):
    """Static (start, size) slices of the leading dim for the DMA copy."""
    if nbytes <= _CHUNK_THRESHOLD_BYTES or leading < 2:
        return ((0, leading),)
    n = min(leading, _MAX_CHUNKS)
    base, rem = divmod(leading, n)
    bounds, start = [], 0
    for i in range(n):
        size = base + (1 if i < rem else 0)
        bounds.append((start, size))
        start += size
    return tuple(bounds)


def _make_hbm_copy_kernel(bounds):
    """Materialized identity: N parallel HBM->HBM DMAs (start all, wait all)."""

    def kernel(x_ref, o_ref, sem):
        copies = []
        for i, (start, size) in enumerate(bounds):
            cp = pltpu.make_async_copy(
                x_ref.at[pl.ds(start, size)],
                o_ref.at[pl.ds(start, size)],
                sem.at[i],
            )
            cp.start()
            copies.append(cp)
        for cp in copies:
            cp.wait()

    return kernel


def _identity_copy(x):
    """Fresh-buffer identity of `x` via direct HBM->HBM async copies."""
    nbytes = x.size * x.dtype.itemsize
    leading = x.shape[0] if x.ndim >= 1 else 1
    bounds = _chunk_bounds(leading, nbytes)

    return pl.pallas_call(
        _make_hbm_copy_kernel(bounds),
        out_shape=jax.ShapeDtypeStruct(x.shape, x.dtype),
        in_specs=[pl.BlockSpec(memory_space=pl.ANY)],   # raw HBM ref, no auto-DMA
        out_specs=pl.BlockSpec(memory_space=pl.ANY),
        scratch_shapes=[pltpu.SemaphoreType.DMA((len(bounds),))],
        cost_estimate=pl.CostEstimate(
            flops=0, transcendentals=0, bytes_accessed=2 * nbytes),
    )(x)


class AbstractSequencePallas:
    """JAX/Pallas mirror of pyshred AbstractSequence (abstract base)."""

    model_name = "ABSTRACT_SEQUENCE"

    def __init__(self):
        # Lazily initialized, exactly like the PyTorch module.
        self.is_initialized = False

    def initialize(self, input_size):
        self.input_size = input_size
        self.is_initialized = True

    def forward(self, x, *, copy=False):
        if not self.is_initialized:
            raise RuntimeError(
                "The sequence model is not initialized. Call `initialize` first."
            )
        assert x.shape[-1] == self.input_size

        if not copy:
            # Zero-cost identity: no custom call, no defensive copy, no DMA.
            return x

        # Fresh output buffer requested: chunked HBM->HBM DMA copy.
        return _identity_copy(x)

    def __call__(self, x, **kwargs):
        return self.forward(x, **kwargs)


if __name__ == "__main__":
    key = jax.random.PRNGKey(0)
    batch, seq, input_size = 2, 8, 32
    x = jax.random.normal(key, (batch, seq, input_size), dtype=jnp.float32)

    model = AbstractSequencePallas()

    # The un-initialized path must raise, matching the PyTorch semantics.
    raised = False
    try:
        model(x)
    except RuntimeError:
        raised = True
    assert raised, "expected RuntimeError before initialize()"

    model.initialize(input_size)

    # Default (zero-cost, no-kernel) identity path.
    out_id = jax.block_until_ready(model(x))
    assert out_id.shape == x.shape and out_id.dtype == x.dtype
    assert bool(jnp.array_equal(out_id, x)), "identity mismatch"

    # Materialized-copy path, small tensor -> single HBM->HBM DMA.
    out_copy = jax.block_until_ready(model(x, copy=True))
    assert out_copy.shape == x.shape and out_copy.dtype == x.dtype
    assert bool(jnp.array_equal(out_copy, x)), "DMA-copy identity mismatch"

    # Larger tensor (> threshold) -> multi-descriptor chunked DMA path.
    big_feat = 1024
    xl = jax.random.normal(jax.random.PRNGKey(0), (8, 64, big_feat),
                           dtype=jnp.float32)  # 2 MiB
    model_big = AbstractSequencePallas()
    model_big.initialize(big_feat)
    out_big = jax.block_until_ready(model_big(xl, copy=True))
    assert out_big.shape == xl.shape and out_big.dtype == xl.dtype
    assert bool(jnp.array_equal(out_big, xl)), "chunked DMA-copy mismatch"

    print("KERNEL_OK")
</pallas_src>

<mosaic_0001>
module attributes {stable_mosaic.version = 11 : i64} {
  func.func @kernel(%arg0: memref<2x8x32xf32, #tpu.memory_space<any>>, %arg1: memref<2x8x32xf32, #tpu.memory_space<any>>, %arg2: memref<1x!tpu.dma_semaphore, #tpu.memory_space<semaphore_mem>>) attributes {dimension_semantics = [], scalar_prefetch = 0 : i64, scratch_operands = 1 : i64, tpu.core_type = #tpu.core_type<tc>} {
    %c0_i32 = arith.constant 0 : i32
    %c0_i32_0 = arith.constant 0 : i32
    %c0_i32_1 = arith.constant 0 : i32
    %c0_i32_2 = arith.constant 0 : i32
    %0 = tpu.memref_slice %arg0[%c0_i32_0, %c0_i32_1, %c0_i32_2] : memref<2x8x32xf32, #tpu.memory_space<any>> -> memref<2x8x32xf32, #tpu.memory_space<any>>
    %c0_i32_3 = arith.constant 0 : i32
    %c0_i32_4 = arith.constant 0 : i32
    %c0_i32_5 = arith.constant 0 : i32
    %1 = tpu.memref_slice %arg1[%c0_i32_3, %c0_i32_4, %c0_i32_5] : memref<2x8x32xf32, #tpu.memory_space<any>> -> memref<2x8x32xf32, #tpu.memory_space<any>>
    %2 = tpu.memref_slice %arg2[%c0_i32] : memref<1x!tpu.dma_semaphore, #tpu.memory_space<semaphore_mem>> -> memref<1x!tpu.dma_semaphore, #tpu.memory_space<semaphore_mem>>
    %3 = tpu.memref_squeeze %2 : memref<1x!tpu.dma_semaphore, #tpu.memory_space<semaphore_mem>> -> memref<!tpu.dma_semaphore, #tpu.memory_space<semaphore_mem>>
    tpu.enqueue_dma source(%0 : memref<2x8x32xf32, #tpu.memory_space<any>>) target(%1 : memref<2x8x32xf32, #tpu.memory_space<any>>) target_semaphore(%3 : memref<!tpu.dma_semaphore, #tpu.memory_space<semaphore_mem>>)
    %c0_i32_6 = arith.constant 0 : i32
    %c0_i32_7 = arith.constant 0 : i32
    %c0_i32_8 = arith.constant 0 : i32
    %c0_i32_9 = arith.constant 0 : i32
    %4 = tpu.memref_slice %arg0[%c0_i32_7, %c0_i32_8, %c0_i32_9] : memref<2x8x32xf32, #tpu.memory_space<any>> -> memref<2x8x32xf32, #tpu.memory_space<any>>
    %c0_i32_10 = arith.constant 0 : i32
    %c0_i32_11 = arith.constant 0 : i32
    %c0_i32_12 = arith.constant 0 : i32
    %5 = tpu.memref_slice %arg1[%c0_i32_10, %c0_i32_11, %c0_i32_12] : memref<2x8x32xf32, #tpu.memory_space<any>> -> memref<2x8x32xf32, #tpu.memory_space<any>>
    %6 = tpu.memref_slice %arg2[%c0_i32_6] : memref<1x!tpu.dma_semaphore, #tpu.memory_space<semaphore_mem>> -> memref<1x!tpu.dma_semaphore, #tpu.memory_space<semaphore_mem>>
    %7 = tpu.memref_squeeze %6 : memref<1x!tpu.dma_semaphore, #tpu.memory_space<semaphore_mem>> -> memref<!tpu.dma_semaphore, #tpu.memory_space<semaphore_mem>>
    tpu.wait_dma2 semaphore(%7 : memref<!tpu.dma_semaphore, #tpu.memory_space<semaphore_mem>>) src(%4 : memref<2x8x32xf32, #tpu.memory_space<any>>) dst(%5 : memref<2x8x32xf32, #tpu.memory_space<any>>)
    return
  }
}

</mosaic_0001>

<llo_original>
// kernel: tpu_custom_call.1
$region0: #{tpu_custom_call.1}
  #allocation0 [shape = 'u32[]', space=smem, size = 0x4, offset = 0x4, fixed_abs, tag = 'smem constant byte address 0x4 - core index']
  #allocation1 [shape = 'u32[144,128]{1,0:T(1,128)}', space=vmem, size = 0x12000, scoped, tag = 'internal scratch']
  #allocation2 [shape = 's32[1]{0}', space=sflag, size = 0x4, scoped, tag = 'scratch operand']
  #allocation3 [shape = 's32[]', space=sflag, size = 0x4, offset = 0, fixed_abs, tag = 'sflag constant byte address 0x0 - dummy sync flag']
  #allocation4 [shape = 'u32[0]{0}', space=smem, size = 0, offset = 0, fixed_abs, tag = 'smem constant byte address 0x0 - null']
  %s0 = inlined_call_operand.hbm [shape: f32[2,8,32], index: 0, kind: input, shape index: {}]
  %s1 = inlined_call_operand.hbm [shape: f32[2,8,32], index: 1, kind: output, shape index: {}]
  %s2 = sld [smem:[#allocation0]]
  $region2: #{tpu_custom_call.1} parent=0
    _
  %s4 = ssub.s32 1, %s2
  %s5 = scalar_select 0, %s4, %s2
  %s7 = sshll.u32 1, 14
  %s8 = sxor.u32 4294967295, %s7
  %s11 = sshll.u32 3, 24
  %s12 = sxor.u32 4294967295, %s11
  %s13 = sand.u32 0, %s12
  %s15 = sor.u32 %s13, 0
  %18 = dma.general %s0, 256, %s1, [#allocation2], [#allocation3], [#allocation4], %s15, 0
  %s19 = smul.u32 2, 8
  %s20 = smul.u32 %s19, 1
  %s21 = sshll.u32 %s20, 4
  %22 = dma.done [#allocation2], %s21
  %23 = vsyncmov [#allocation2]
  %s24 = vpop.sfrf %23
  %p25 = scmp.eq.s32.totalorder %s24, 0
  %p26 = pneg %p25
  %28 = shalt.err (%p26)

</llo_original>
